<compile_context>
chip_gen: v7x
topology: tpu7x:2x2x1
jax: 0.10.0
libtpu: 0.0.40
codegen_flags: <defaults>
</compile_context>

<pallas_src>
import functools

import jax
import jax.numpy as jnp
from jax import lax
from jax.experimental import pallas as pl
from jax.experimental.pallas import tpu as pltpu

_LANE_TILE_CAP = 8192                 # max lane-axis tile (multiple of 128)
_TARGET_BLOCK_BYTES = 3 * 1024 * 1024 # ~3 MiB blocks: roofline on v5e/v6e/v7x


def _sublane_multiple(dtype):
    # 8 for f32, 16 for bf16, 32 for int8/fp8 (native sublane packing).
    return max(8, 32 // jnp.dtype(dtype).itemsize)


def _pick_tiles(r_dim, s_dim, dtype):
    """Lane-dense tile_s up to 8192; tile_r sized so a block is ~3 MiB."""
    itemsize = jnp.dtype(dtype).itemsize
    sub = _sublane_multiple(dtype)
    tile_s = s_dim if s_dim <= _LANE_TILE_CAP else _LANE_TILE_CAP
    rows = _TARGET_BLOCK_BYTES // max(1, tile_s * itemsize)
    rows = max(sub, (rows // sub) * sub)          # multiple of sublane packing
    tile_r = r_dim if r_dim <= rows else rows     # full extent is always legal
    return tile_r, tile_s


def _vmem_limit_bytes(tile_r, tile_s, itemsize, extra_bytes=0):
    """Double-buffered in + out blocks + mask + headroom, capped at 32 MiB."""
    block = tile_r * tile_s * itemsize
    need = 2 * 2 * block + 2 * extra_bytes + (4 << 20)
    return int(min(max(need, 8 << 20), 32 << 20))


# ---------------------------------------------------------------------------
# nd == 2 / nd == 3 : channel dropout. mask_ref is (tile_r, 1) f32, already
# scaled by 1/(1-p) (0.0 for dropped channels). Multiply in native dtype.
# ---------------------------------------------------------------------------
def _channel_dropout_kernel(mask_ref, x_ref, o_ref):
    o_ref[...] = x_ref[...] * mask_ref[...].astype(o_ref.dtype)


def _run_channel_dropout(x2d, mask_scaled):
    r_dim, s_dim = x2d.shape
    tile_r, tile_s = _pick_tiles(r_dim, s_dim, x2d.dtype)
    grid = (pl.cdiv(r_dim, tile_r), pl.cdiv(s_dim, tile_s))
    itemsize = jnp.dtype(x2d.dtype).itemsize
    return pl.pallas_call(
        _channel_dropout_kernel,
        out_shape=jax.ShapeDtypeStruct((r_dim, s_dim), x2d.dtype),
        grid_spec=pltpu.PrefetchScalarGridSpec(
            num_scalar_prefetch=0,
            grid=grid,
            in_specs=[
                # Rows outer / lane axis innermost: mask block index (r, 0)
                # is unchanged across the inner sweep -> no re-DMA of the mask.
                pl.BlockSpec((tile_r, 1), lambda r, s: (r, 0)),
                pl.BlockSpec((tile_r, tile_s), lambda r, s: (r, s)),
            ],
            out_specs=pl.BlockSpec((tile_r, tile_s), lambda r, s: (r, s)),
        ),
        compiler_params=pltpu.CompilerParams(
            dimension_semantics=("parallel", "parallel"),
            vmem_limit_bytes=_vmem_limit_bytes(
                tile_r, tile_s, itemsize, extra_bytes=tile_r * 4),
        ),
    )(mask_scaled, x2d)


# ---------------------------------------------------------------------------
# nd == 1 : element-wise dropout. Counter-based hash PRNG over the global
# element index (murmur3 finalizer), keep iff hash >= threshold,
# P(keep) = 1 - prob. No mask array in HBM, lowers everywhere.
# ---------------------------------------------------------------------------
def _element_dropout_kernel(seed_ref, x_ref, o_ref, *,
                            threshold, scale, s_dim, tile_r, tile_s):
    r0 = (pl.program_id(0) * tile_r).astype(jnp.uint32)
    s0 = (pl.program_id(1) * tile_s).astype(jnp.uint32)
    rows = lax.broadcasted_iota(jnp.int32, x_ref.shape, 0).astype(jnp.uint32) + r0
    cols = lax.broadcasted_iota(jnp.int32, x_ref.shape, 1).astype(jnp.uint32) + s0
    idx = rows * jnp.uint32(s_dim) + cols             # global element id (mod 2^32)

    seed = seed_ref[0].astype(jnp.uint32)
    h = idx ^ (seed * jnp.uint32(0x9E3779B9))
    # murmur3 finalizer: good avalanche on sequential counters.
    h = (h ^ (h >> 16)) * jnp.uint32(0x85EBCA6B)
    h = (h ^ (h >> 13)) * jnp.uint32(0xC2B2AE35)
    h = h ^ (h >> 16)

    keep = h >= jnp.uint32(threshold)
    xv = x_ref[...]
    scale_c = jnp.asarray(scale, dtype=xv.dtype)
    o_ref[...] = jnp.where(keep, xv * scale_c, jnp.zeros_like(xv))


def _run_element_dropout(x2d, seed, prob):
    r_dim, s_dim = x2d.shape
    tile_r, tile_s = _pick_tiles(r_dim, s_dim, x2d.dtype)
    grid = (pl.cdiv(r_dim, tile_r), pl.cdiv(s_dim, tile_s))
    # Clamp: round(prob * 2^32) can hit 2^32 for prob ~ 1, which would wrap.
    threshold = min(int(round(prob * float(2 ** 32))), 2 ** 32 - 1)
    itemsize = jnp.dtype(x2d.dtype).itemsize
    kernel = functools.partial(
        _element_dropout_kernel,
        threshold=threshold, scale=1.0 / (1.0 - prob),
        s_dim=s_dim, tile_r=tile_r, tile_s=tile_s)
    return pl.pallas_call(
        kernel,
        out_shape=jax.ShapeDtypeStruct((r_dim, s_dim), x2d.dtype),
        grid_spec=pltpu.PrefetchScalarGridSpec(
            num_scalar_prefetch=1,
            grid=grid,
            in_specs=[pl.BlockSpec((tile_r, tile_s), lambda r, s, seed_ref: (r, s))],
            out_specs=pl.BlockSpec((tile_r, tile_s), lambda r, s, seed_ref: (r, s)),
        ),
        compiler_params=pltpu.CompilerParams(
            dimension_semantics=("parallel", "parallel"),
            vmem_limit_bytes=_vmem_limit_bytes(tile_r, tile_s, itemsize),
        ),
    )(seed, x2d)


def _lane_dense_factor(total):
    """Largest multiple-of-128 divisor of `total` that is <= _LANE_TILE_CAP."""
    cap = min(_LANE_TILE_CAP, total)
    for cand in range((cap // 128) * 128, 0, -128):
        if total % cand == 0:
            return cand
    return None


# ---------------------------------------------------------------------------
# Public wrapper mirroring dropout23DUnit.forward
# ---------------------------------------------------------------------------
def dropout23d_unit(x, prob=0.0, nd=2, *, key, training=True):
    assert nd in (1, 2, 3), 'nd is not correctly specified!!!!, it should be {1,2,3}'
    assert 0.0 <= prob <= 1.0
    if (not training) or prob == 0.0:
        return x                       # module default / eval mode: identity, free
    if prob >= 1.0:
        return jnp.zeros_like(x)

    if nd in (2, 3):                   # nn.Dropout2d / nn.Dropout3d
        assert x.ndim >= 3, "channel dropout expects (N, C, *spatial)"
        n, c = x.shape[0], x.shape[1]
        spatial = 1
        for d in x.shape[2:]:
            spatial *= d
        keep = jax.random.bernoulli(key, 1.0 - prob, (n, c))
        mask_scaled = (keep.astype(jnp.float32)
                       * (1.0 / (1.0 - prob))).reshape(n * c, 1)
        x2d = x.reshape(n * c, spatial)           # free reshape, no transpose
        y2d = _run_channel_dropout(x2d, mask_scaled)
        return y2d.reshape(x.shape)

    # nd == 1 : nn.Dropout (element-wise). Layout is free -> flatten the whole
    # tensor into a lane-dense slab whenever possible (guarantees unmasked vst).
    total = 1
    for d in x.shape:
        total *= d
    s_lane = _lane_dense_factor(total)
    if s_lane is not None:
        x2d = x.reshape(total // s_lane, s_lane)
    elif x.ndim >= 2:
        s_dim = x.shape[-1]
        x2d = x.reshape(total // s_dim, s_dim)    # fallback: keep last dim on lanes
    else:
        x2d = x.reshape(1, total)
    seed = jax.random.randint(key, (1,), 0, 2 ** 31 - 1, dtype=jnp.int32)
    y2d = _run_element_dropout(x2d, seed, float(prob))
    return y2d.reshape(x.shape)


# ---------------------------------------------------------------------------
# Pure-JAX reference for channel dropout (same key -> same mask -> exact match)
# ---------------------------------------------------------------------------
def _ref_channel_dropout(x, prob, key):
    n, c = x.shape[0], x.shape[1]
    keep = jax.random.bernoulli(key, 1.0 - prob, (n, c))
    mask = keep.astype(jnp.float32) * (1.0 / (1.0 - prob))
    bshape = (n, c) + (1,) * (x.ndim - 2)
    return (x.astype(jnp.float32) * mask.reshape(bshape)).astype(x.dtype)


if __name__ == "__main__":
    root = jax.random.PRNGKey(0)
    kx2, kx3, kd1, kd2, kd3 = jax.random.split(root, 5)

    # nd=2, module default prob=0 -> identity, 4-D input (N, C, H, W)
    x2 = jax.random.normal(kx2, (2, 4, 16, 16), dtype=jnp.float32)
    y2_id = jax.block_until_ready(dropout23d_unit(x2, prob=0.0, nd=2, key=kd2))
    assert y2_id.shape == x2.shape
    assert jnp.array_equal(y2_id, x2), "prob=0 must be the identity"

    # nd=2, prob=0.5 -> channel dropout, exact vs reference
    y2 = jax.block_until_ready(dropout23d_unit(x2, prob=0.5, nd=2, key=kd2))
    ref2 = _ref_channel_dropout(x2, 0.5, kd2)
    assert jnp.allclose(y2, ref2, atol=1e-6), "nd=2 channel dropout mismatch"

    # nd=3, prob=0.3 -> 5-D input (N, C, D, H, W)
    x3 = jax.random.normal(kx3, (2, 4, 8, 16, 16), dtype=jnp.float32)
    y3 = jax.block_until_ready(dropout23d_unit(x3, prob=0.3, nd=3, key=kd3))
    ref3 = _ref_channel_dropout(x3, 0.3, kd3)
    assert jnp.allclose(y3, ref3, atol=1e-6), "nd=3 channel dropout mismatch"

    # nd=1, prob=0.25 -> element dropout (in-kernel hash PRNG): structural check,
    # every element is either 0 or x/(1-p), and the keep-rate is about 1-p.
    p1 = 0.25
    y1 = jax.block_until_ready(dropout23d_unit(x2, prob=p1, nd=1, key=kd1))
    scale = 1.0 / (1.0 - p1)
    is_zero = (y1 == 0.0)
    is_scaled = jnp.isclose(y1, x2 * scale, rtol=1e-5, atol=1e-6)
    assert bool(jnp.all(is_zero | is_scaled)), "nd=1 produced an invalid value"
    keep_frac = float(jnp.mean((~is_zero).astype(jnp.float32)))
    assert abs(keep_frac - (1.0 - p1)) < 0.08, f"keep fraction off: {keep_frac}"

    # prob ~ 1 edge case: clamped threshold must not wrap (near-everything dropped)
    y_hi = jax.block_until_ready(
        dropout23d_unit(x2, prob=1.0 - 1e-12, nd=1, key=kd1))
    assert float(jnp.mean((y_hi == 0.0).astype(jnp.float32))) > 0.99

    # eval mode -> identity
    y_eval = dropout23d_unit(x2, prob=0.5, nd=2, key=kd2, training=False)
    assert jnp.array_equal(y_eval, x2)

    print("KERNEL_OK")
</pallas_src>

<mosaic_0001>
module attributes {stable_mosaic.version = 11 : i64} {
  func.func @_channel_dropout_kernel(%arg0: i32, %arg1: i32, %arg2: memref<8x1xf32, #tpu.memory_space<vmem>>, %arg3: memref<8x256xf32, #tpu.memory_space<vmem>>, %arg4: memref<8x256xf32, #tpu.memory_space<vmem>>) attributes {dimension_semantics = [#tpu.dimension_semantics<parallel>, #tpu.dimension_semantics<parallel>], iteration_bounds = array<i64: 1, 1>, scalar_prefetch = 0 : i64, scratch_operands = 0 : i64, tpu.core_type = #tpu.core_type<tc>, window_params = [{transform_indices = @transform_0, window_bounds = array<i64: 8, 1>}, {transform_indices = @transform_1, window_bounds = array<i64: 8, 256>}, {transform_indices = @transform_2, window_bounds = array<i64: 8, 256>}]} {
    %c0 = arith.constant 0 : index
    %c0_0 = arith.constant 0 : index
    %0 = vector.load %arg3[%c0, %c0_0] : memref<8x256xf32, #tpu.memory_space<vmem>>, vector<8x256xf32>
    %c0_1 = arith.constant 0 : index
    %c0_2 = arith.constant 0 : index
    %1 = vector.load %arg2[%c0_1, %c0_2] : memref<8x1xf32, #tpu.memory_space<vmem>>, vector<8x1xf32>
    %2 = vector.broadcast %1 : vector<8x1xf32> to vector<8x256xf32>
    %3 = arith.mulf %0, %2 : vector<8x256xf32>
    %c0_3 = arith.constant 0 : index
    %c0_4 = arith.constant 0 : index
    %4 = vector.load %arg4[%c0_3, %c0_4] : memref<8x256xf32, #tpu.memory_space<vmem>>, vector<8x256xf32>
    tpu.vector_store %arg4[%c0_3, %c0_4], %3 {strides = array<i32>} : memref<8x256xf32, #tpu.memory_space<vmem>>, vector<8x256xf32>,
    return
  }
  func.func @transform_0(%arg0: i32, %arg1: i32) -> (i32, i32) {
    %c0_i32 = arith.constant 0 : i32
    %c0_i32_0 = arith.constant 0 : i32
    return %arg0, %c0_i32 : i32, i32
  }
  func.func @transform_1(%arg0: i32, %arg1: i32) -> (i32, i32) {
    %c0_i32 = arith.constant 0 : i32
    return %arg0, %arg1 : i32, i32
  }
  func.func @transform_2(%arg0: i32, %arg1: i32) -> (i32, i32) {
    %c0_i32 = arith.constant 0 : i32
    return %arg0, %arg1 : i32, i32
  }
}

</mosaic_0001>

<llo_original>
// kernel: tpu_custom_call.1
$region0: #{tpu_custom_call.1}
  #allocation0 [shape = 'u32[]', space=smem, size = 0x4, offset = 0x4, fixed_abs, tag = 'smem constant byte address 0x4 - core index']
  #allocation1 [shape = 'u32[144,128]{1,0:T(1,128)}', space=vmem, size = 0x12000, scoped, tag = 'internal scratch']
  %s0 = inlined_call_operand.vmem [shape: f32[8,1], index: 0, kind: input, shape index: {}]
  %s1 = inlined_call_operand.hbm [shape: f32[8,256], index: 1, kind: input, shape index: {}]
  %s2 = inlined_call_operand.hbm [shape: f32[8,256], index: 2, kind: output, shape index: {}]
  %s3 = sld [smem:[#allocation0]]
  $region22: #{tpu_custom_call.1} parent=0
    _
  %s5 = ssub.s32 1, %s3
  %s6 = scalar_select 0, %s5, %s3
  $region1: #{tpu_custom_call.1} parent=0
    #allocation2 [shape = 'u8[8192]{0}', space=vmem, size = 0x2000, scoped, tag = 'input window, operand 1, single buffered']
    #allocation3 [shape = 's32[1]{0}', space=sflag, size = 0x4, scoped, tag = 'scoped memory for tpu_custom_call.1']
    #allocation4 [shape = 's32[1]{0}', space=sflag, size = 0x4, scoped, tag = 'scoped memory for tpu_custom_call.1']
    #allocation5 [shape = 'u8[8192]{0}', space=vmem, size = 0x2000, scoped, tag = 'output window, operand 0, single buffered']
    %7 = vsyncpa [#allocation3], 0
    %8 = vsyncpa [#allocation4], 0
    // Predicated region
    $region2: #{tpu_custom_call.1} parent=1 // pred_check
      _
    $region3: #{tpu_custom_call.1} parent=1 // pred_check_branch
      %10 = sbr.rel (0) target = $region5
    $region4: #{tpu_custom_call.1} parent=1 // pred_region
      _
    $region5: #{tpu_custom_call.1} parent=1 // pred_fallthru
      _
    // Predicated region
    $region6: #{tpu_custom_call.1} parent=1 // pred_check
      _
    $region7: #{tpu_custom_call.1} parent=1 // pred_check_branch
      %12 = sbr.rel (0) target = $region9
    $region8: #{tpu_custom_call.1} parent=1 // pred_region
      %s14 = ssub.s32 256, 256
      %15 = vsyncadd [#allocation3], %s14
      %s17 = sshll.u32 [#allocation2], 4
      %s18 = int_to_ptr.vmem [resolvable:$true] %s17
      %20 = dma.hbm_to_vmem [thread:$0]  %s1, 256, %s18, [#allocation3]
    $region9: #{tpu_custom_call.1} parent=1 // pred_fallthru
      _
    // Predicated region
    $region10: #{tpu_custom_call.1} parent=1 // pred_check
      _
    $region11: #{tpu_custom_call.1} parent=1 // pred_check_branch
      %22 = sbr.rel (0) target = $region13
    $region12: #{tpu_custom_call.1} parent=1 // pred_region
      %23 = dma.done [#allocation3], 256
    $region13: #{tpu_custom_call.1} parent=1 // pred_fallthru
      _
    %v24 = vld [vmem:[#allocation2] sm:$0xff]
    %v25 = vld [vmem:[#allocation2 + $0x8] sm:$0xff]
    %v26 = vld [vmem:[%s0] sm:$0xff]
    %28 = vset.pattern.permute.xlu0 0
    %29 = vperm.xlu0 %28, %v26
    %v30 = vpop.permute.xlu0 %29
    %v32 = vmul.f32 %v24, %v30
    %v33 = vmul.f32 %v25, %v30
    %34 = vst [vmem:[#allocation5] sm:$0xff] %v32
    %35 = vst [vmem:[#allocation5 + $0x8] sm:$0xff] %v33
    // Predicated region
    $region14: #{tpu_custom_call.1} parent=1 // pred_check
      _
    $region15: #{tpu_custom_call.1} parent=1 // pred_check_branch
      %37 = sbr.rel (0) target = $region17
    $region16: #{tpu_custom_call.1} parent=1 // pred_region
      %s39 = ssub.s32 256, 256
      %40 = vsyncadd [#allocation4], %s39
      %s42 = sshll.u32 [#allocation5], 4
      %s43 = int_to_ptr.vmem [resolvable:$true] %s42
      %45 = dma.vmem_to_hbm [thread:$0]  %s43, 256, %s2, [#allocation4]
    $region17: #{tpu_custom_call.1} parent=1 // pred_fallthru
      _
    // Predicated region
    $region18: #{tpu_custom_call.1} parent=1 // pred_check
      _
    $region19: #{tpu_custom_call.1} parent=1 // pred_check_branch
      %47 = sbr.rel (0) target = $region21
    $region20: #{tpu_custom_call.1} parent=1 // pred_region
      %48 = dma.done [#allocation4], 256
    $region21: #{tpu_custom_call.1} parent=1 // pred_fallthru
      _
    %49 = vsyncpa [#allocation3], 1
    %50 = vsyncpa [#allocation4], 1

</llo_original>
